<compile_context>
chip_gen: v5e
topology: v5e:2x2
jax: 0.10.0
libtpu: 0.0.40
codegen_flags: <defaults>
</compile_context>

<pallas_src>
import jax
import jax.numpy as jnp
from jax import lax
from jax.experimental import pallas as pl
from jax.experimental.pallas import tpu as pltpu


# ---------------- fused Pallas kernel ----------------

def _residual_block_kernel(xvp_ref, w1_ref, b1_ref, w2_ref, b2_ref,
                           o_ref, y1p_ref):
    # xvp_ref : (H+2, W*C)  input, vertically zero-padded, lane-dense rows
    # w1_ref  : (3, W*C, W*C) banded conv1 weights (BN1 scale folded in)
    # b1_ref  : (1, W*C)      BN1 bias, tiled across W
    # w2_ref  : (3, W*C, W*C) banded conv2 weights (BN2 scale folded in)
    # b2_ref  : (1, W*C)      BN2 bias, tiled across W
    # o_ref   : (H, W*C)      output
    # y1p_ref : (H+2, W*C)    VMEM scratch: vertically padded intermediate
    h, wc = o_ref.shape
    xvp = xvp_ref[...]

    # ---- conv1 (+ folded BN1) + ReLU : 3 lane-dense banded matmuls ----
    acc = jnp.dot(xvp[0:h, :], w1_ref[0], preferred_element_type=jnp.float32)
    acc = acc + jnp.dot(xvp[1:h + 1, :], w1_ref[1],
                        preferred_element_type=jnp.float32)
    acc = acc + jnp.dot(xvp[2:h + 2, :], w1_ref[2],
                        preferred_element_type=jnp.float32)
    y1 = jnp.maximum(acc + b1_ref[...], 0.0)                 # (H, W*C)

    # vertical SAME padding of y1 for conv2 (zero row above & below)
    y1p_ref[...] = jnp.zeros_like(y1p_ref)
    y1p_ref[pl.ds(1, h), :] = y1
    y1p = y1p_ref[...]

    # ---- conv2 (+ folded BN2) + ReLU (end of nn.Sequential) ----
    acc = jnp.dot(y1p[0:h, :], w2_ref[0], preferred_element_type=jnp.float32)
    acc = acc + jnp.dot(y1p[1:h + 1, :], w2_ref[1],
                        preferred_element_type=jnp.float32)
    acc = acc + jnp.dot(y1p[2:h + 2, :], w2_ref[2],
                        preferred_element_type=jnp.float32)
    y2 = jnp.maximum(acc + b2_ref[...], 0.0)

    # ---- residual add + final ReLU (x += identity; x = relu(x)) ----
    identity = xvp[1:h + 1, :]                               # original x rows
    o_ref[...] = jnp.maximum(y2 + identity, 0.0).astype(o_ref.dtype)


# ---------------- wrapper ----------------

@jax.jit
def residual_block_forward(x_nhwc, params):
    """Forward pass of ResidualBlock (no downsample, stride 1), NHWC input."""
    n, h, w, c = x_nhwc.shape
    wc = w * c
    w1b, b1t, w2b, b2t = params

    x_rows = x_nhwc.reshape(n, h, wc)                        # lane-dense rows
    xvp = jnp.pad(x_rows, ((0, 0), (1, 1), (0, 0)))          # vertical SAME pad

    out = pl.pallas_call(
        _residual_block_kernel,
        out_shape=jax.ShapeDtypeStruct((n, h, wc), x_nhwc.dtype),
        grid_spec=pltpu.PrefetchScalarGridSpec(
            num_scalar_prefetch=0,
            grid=(n,),
            in_specs=[
                pl.BlockSpec((None, h + 2, wc), lambda i: (i, 0, 0)),  # x (padded)
                pl.BlockSpec((3, wc, wc), lambda i: (0, 0, 0)),        # conv1 bands
                pl.BlockSpec((1, wc), lambda i: (0, 0)),               # bn1 bias
                pl.BlockSpec((3, wc, wc), lambda i: (0, 0, 0)),        # conv2 bands
                pl.BlockSpec((1, wc), lambda i: (0, 0)),               # bn2 bias
            ],
            out_specs=pl.BlockSpec((None, h, wc), lambda i: (i, 0, 0)),
            scratch_shapes=[pltpu.VMEM((h + 2, wc), jnp.float32)],
        ),
        compiler_params=pltpu.CompilerParams(
            dimension_semantics=("parallel",)),
    )(xvp, w1b, b1t, w2b, b2t)

    return out.reshape(n, h, w, c)


# ---------------- parameter construction ----------------

def _fold_bn(key, c, eps=1e-5):
    kg, kb, km, kv = jax.random.split(key, 4)
    gamma = 1.0 + 0.1 * jax.random.normal(kg, (c,), jnp.float32)
    beta = 0.1 * jax.random.normal(kb, (c,), jnp.float32)
    mean = 0.1 * jax.random.normal(km, (c,), jnp.float32)
    var = jax.random.uniform(kv, (c,), jnp.float32, minval=0.5, maxval=1.5)
    scale = gamma / jnp.sqrt(var + eps)
    bias = beta - mean * scale
    return scale, bias


def _band_weights(w_hwio, width):
    """(3,3,C,C) HWIO weights -> (3, width*C, width*C) banded row matrices.

    B[dy][w'*C+ci, w*C+co] = W[dy, w'-w+1, ci, co] if |w'-w| <= 1 else 0,
    which implements the dx taps of a 3x3 SAME conv along the W axis.
    """
    c = w_hwio.shape[-1]
    wp = jnp.arange(width)[:, None]          # source row-block w'
    wd = jnp.arange(width)[None, :]          # destination row-block w
    dx = wp - wd + 1                         # (width, width)
    valid = (dx >= 0) & (dx <= 2)
    dxc = jnp.clip(dx, 0, 2)
    band = w_hwio[:, dxc]                                    # (3, W, W, C, C)
    band = band * valid[None, :, :, None, None].astype(w_hwio.dtype)
    band = jnp.transpose(band, (0, 1, 3, 2, 4))              # (3, W, C, W, C)
    return band.reshape(3, width * c, width * c)


def make_params(key, c, width):
    k1, k2, k3, k4 = jax.random.split(key, 4)
    # Conv weights in PyTorch OIHW convention, then converted to HWIO.
    w1_oihw = 0.1 * jax.random.normal(k1, (c, c, 3, 3), jnp.float32)
    w2_oihw = 0.1 * jax.random.normal(k2, (c, c, 3, 3), jnp.float32)
    w1_hwio = jnp.transpose(w1_oihw, (2, 3, 1, 0))           # (3,3,Cin,Cout)
    w2_hwio = jnp.transpose(w2_oihw, (2, 3, 1, 0))
    s1, b1 = _fold_bn(k3, c)
    s2, b2 = _fold_bn(k4, c)

    # Fold BN scale into the conv weights (output-channel scaling).
    w1f = w1_hwio * s1[None, None, None, :]
    w2f = w2_hwio * s2[None, None, None, :]
    w1b = _band_weights(w1f, width)                          # (3, W*C, W*C)
    w2b = _band_weights(w2f, width)
    b1t = jnp.tile(b1, width).reshape(1, width * c)
    b2t = jnp.tile(b2, width).reshape(1, width * c)

    params = (w1b, b1t, w2b, b2t)
    ref_params = (w1_hwio, s1, b1, w2_hwio, s2, b2)
    return params, ref_params


# ---------------- pure-JAX reference (correctness check) ----------------

def reference_forward(x_nhwc, w1_hwio, s1, b1, w2_hwio, s2, b2):
    def conv(x, w):
        return lax.conv_general_dilated(
            x, w, window_strides=(1, 1), padding="SAME",
            dimension_numbers=("NHWC", "HWIO", "NHWC"))
    y = jnp.maximum(conv(x_nhwc, w1_hwio) * s1 + b1, 0.0)
    y = jnp.maximum(conv(y, w2_hwio) * s2 + b2, 0.0)
    return jnp.maximum(y + x_nhwc, 0.0)


if __name__ == "__main__":
    key = jax.random.PRNGKey(0)
    kx, kp = jax.random.split(key)

    # ResidualBlock(out_=8), no downsample. W*C = 16*8 = 128 -> lane-dense rows.
    N, C, H, W = 2, 8, 16, 16
    x_nchw = jax.random.normal(kx, (N, C, H, W), jnp.float32)   # PyTorch layout
    x_nhwc = jnp.transpose(x_nchw, (0, 2, 3, 1))                # kernel layout

    params, ref_params = make_params(kp, C, W)

    out_nhwc = jax.block_until_ready(residual_block_forward(x_nhwc, params))
    out_nchw = jnp.transpose(out_nhwc, (0, 3, 1, 2))            # back to NCHW

    ref = reference_forward(x_nhwc, *ref_params)
    assert out_nchw.shape == (N, C, H, W)
    assert jnp.allclose(out_nhwc, ref, atol=1e-4, rtol=1e-4), "mismatch vs reference"

    print("KERNEL_OK")
</pallas_src>

<mosaic_0001>
module attributes {stable_mosaic.version = 11 : i64} {
  func.func @_residual_block_kernel(%arg0: i32, %arg1: memref<1x18x128xf32, #tpu.memory_space<vmem>>, %arg2: memref<3x128x128xf32, #tpu.memory_space<vmem>>, %arg3: memref<1x128xf32, #tpu.memory_space<vmem>>, %arg4: memref<3x128x128xf32, #tpu.memory_space<vmem>>, %arg5: memref<1x128xf32, #tpu.memory_space<vmem>>, %arg6: memref<1x16x128xf32, #tpu.memory_space<vmem>>, %arg7: memref<18x128xf32, #tpu.memory_space<vmem>>) attributes {dimension_semantics = [#tpu.dimension_semantics<parallel>], iteration_bounds = array<i64: 2>, scalar_prefetch = 0 : i64, scratch_operands = 1 : i64, tpu.core_type = #tpu.core_type<tc>, window_params = [{transform_indices = @transform_0, window_bounds = array<i64: 1, 18, 128>}, {pipeline_mode = #tpu.pipeline_mode<synchronous>, transform_indices = @transform_1, window_bounds = array<i64: 3, 128, 128>}, {pipeline_mode = #tpu.pipeline_mode<synchronous>, transform_indices = @transform_2, window_bounds = array<i64: 1, 128>}, {pipeline_mode = #tpu.pipeline_mode<synchronous>, transform_indices = @transform_3, window_bounds = array<i64: 3, 128, 128>}, {pipeline_mode = #tpu.pipeline_mode<synchronous>, transform_indices = @transform_4, window_bounds = array<i64: 1, 128>}, {transform_indices = @transform_5, window_bounds = array<i64: 1, 16, 128>}]} {
    %c0 = arith.constant 0 : index
    %c0_0 = arith.constant 0 : index
    %c0_1 = arith.constant 0 : index
    %0 = vector.load %arg1[%c0, %c0_0, %c0_1] : memref<1x18x128xf32, #tpu.memory_space<vmem>>, vector<1x18x128xf32>
    %1 = vector.shape_cast %0 : vector<1x18x128xf32> to vector<18x128xf32>
    %2 = vector.extract_strided_slice %1 {offsets = [0, 0], sizes = [16, 128], strides = [1, 1]} : vector<18x128xf32> to vector<16x128xf32>
    %c0_2 = arith.constant 0 : index
    %c0_3 = arith.constant 0 : index
    %c0_4 = arith.constant 0 : index
    %3 = vector.load %arg2[%c0_2, %c0_3, %c0_4] : memref<3x128x128xf32, #tpu.memory_space<vmem>>, vector<1x128x128xf32>
    %4 = vector.shape_cast %3 : vector<1x128x128xf32> to vector<128x128xf32>
    %cst = arith.constant dense<0.000000e+00> : vector<16x128xf32>
    %5 = tpu.matmul %2, %4, %cst {dimension_numbers = #tpu.dot_dimension_numbers<[1], [0], [0], [1], [0, 0, 1, 1], [], []>} : vector<16x128xf32>, vector<128x128xf32>, vector<16x128xf32> -> vector<16x128xf32>
    %6 = vector.extract_strided_slice %1 {offsets = [1, 0], sizes = [16, 128], strides = [1, 1]} : vector<18x128xf32> to vector<16x128xf32>
    %c1 = arith.constant 1 : index
    %c0_5 = arith.constant 0 : index
    %c0_6 = arith.constant 0 : index
    %7 = vector.load %arg2[%c1, %c0_5, %c0_6] : memref<3x128x128xf32, #tpu.memory_space<vmem>>, vector<1x128x128xf32>
    %8 = vector.shape_cast %7 : vector<1x128x128xf32> to vector<128x128xf32>
    %cst_7 = arith.constant dense<0.000000e+00> : vector<16x128xf32>
    %9 = tpu.matmul %6, %8, %cst_7 {dimension_numbers = #tpu.dot_dimension_numbers<[1], [0], [0], [1], [0, 0, 1, 1], [], []>} : vector<16x128xf32>, vector<128x128xf32>, vector<16x128xf32> -> vector<16x128xf32>
    %10 = arith.addf %5, %9 : vector<16x128xf32>
    %11 = vector.extract_strided_slice %1 {offsets = [2, 0], sizes = [16, 128], strides = [1, 1]} : vector<18x128xf32> to vector<16x128xf32>
    %c2 = arith.constant 2 : index
    %c0_8 = arith.constant 0 : index
    %c0_9 = arith.constant 0 : index
    %12 = vector.load %arg2[%c2, %c0_8, %c0_9] : memref<3x128x128xf32, #tpu.memory_space<vmem>>, vector<1x128x128xf32>
    %13 = vector.shape_cast %12 : vector<1x128x128xf32> to vector<128x128xf32>
    %cst_10 = arith.constant dense<0.000000e+00> : vector<16x128xf32>
    %14 = tpu.matmul %11, %13, %cst_10 {dimension_numbers = #tpu.dot_dimension_numbers<[1], [0], [0], [1], [0, 0, 1, 1], [], []>} : vector<16x128xf32>, vector<128x128xf32>, vector<16x128xf32> -> vector<16x128xf32>
    %15 = arith.addf %10, %14 : vector<16x128xf32>
    %c0_11 = arith.constant 0 : index
    %c0_12 = arith.constant 0 : index
    %16 = vector.load %arg3[%c0_11, %c0_12] : memref<1x128xf32, #tpu.memory_space<vmem>>, vector<1x128xf32>
    %17 = vector.broadcast %16 : vector<1x128xf32> to vector<16x128xf32>
    %18 = arith.addf %15, %17 : vector<16x128xf32>
    %cst_13 = arith.constant 0.000000e+00 : f32
    %19 = vector.broadcast %cst_13 : f32 to vector<16x128xf32>
    %20 = arith.maximumf %18, %19 : vector<16x128xf32>
    %cst_14 = arith.constant 0.000000e+00 : f32
    %21 = vector.broadcast %cst_14 : f32 to vector<18x128xf32>
    %c0_15 = arith.constant 0 : index
    %c0_16 = arith.constant 0 : index
    %22 = vector.load %arg7[%c0_15, %c0_16] : memref<18x128xf32, #tpu.memory_space<vmem>>, vector<18x128xf32>
    tpu.vector_store %arg7[%c0_15, %c0_16], %21 {strides = array<i32>} : memref<18x128xf32, #tpu.memory_space<vmem>>, vector<18x128xf32>,
    %c1_17 = arith.constant 1 : index
    %c0_18 = arith.constant 0 : index
    %23 = vector.load %arg7[%c1_17, %c0_18] : memref<18x128xf32, #tpu.memory_space<vmem>>, vector<16x128xf32>
    tpu.vector_store %arg7[%c1_17, %c0_18], %20 {strides = array<i32>} : memref<18x128xf32, #tpu.memory_space<vmem>>, vector<16x128xf32>,
    %c0_19 = arith.constant 0 : index
    %c0_20 = arith.constant 0 : index
    %24 = vector.load %arg7[%c0_19, %c0_20] : memref<18x128xf32, #tpu.memory_space<vmem>>, vector<18x128xf32>
    %25 = vector.extract_strided_slice %24 {offsets = [0, 0], sizes = [16, 128], strides = [1, 1]} : vector<18x128xf32> to vector<16x128xf32>
    %c0_21 = arith.constant 0 : index
    %c0_22 = arith.constant 0 : index
    %c0_23 = arith.constant 0 : index
    %26 = vector.load %arg4[%c0_21, %c0_22, %c0_23] : memref<3x128x128xf32, #tpu.memory_space<vmem>>, vector<1x128x128xf32>
    %27 = vector.shape_cast %26 : vector<1x128x128xf32> to vector<128x128xf32>
    %cst_24 = arith.constant dense<0.000000e+00> : vector<16x128xf32>
    %28 = tpu.matmul %25, %27, %cst_24 {dimension_numbers = #tpu.dot_dimension_numbers<[1], [0], [0], [1], [0, 0, 1, 1], [], []>} : vector<16x128xf32>, vector<128x128xf32>, vector<16x128xf32> -> vector<16x128xf32>
    %29 = vector.extract_strided_slice %24 {offsets = [1, 0], sizes = [16, 128], strides = [1, 1]} : vector<18x128xf32> to vector<16x128xf32>
    %c1_25 = arith.constant 1 : index
    %c0_26 = arith.constant 0 : index
    %c0_27 = arith.constant 0 : index
    %30 = vector.load %arg4[%c1_25, %c0_26, %c0_27] : memref<3x128x128xf32, #tpu.memory_space<vmem>>, vector<1x128x128xf32>
    %31 = vector.shape_cast %30 : vector<1x128x128xf32> to vector<128x128xf32>
    %cst_28 = arith.constant dense<0.000000e+00> : vector<16x128xf32>
    %32 = tpu.matmul %29, %31, %cst_28 {dimension_numbers = #tpu.dot_dimension_numbers<[1], [0], [0], [1], [0, 0, 1, 1], [], []>} : vector<16x128xf32>, vector<128x128xf32>, vector<16x128xf32> -> vector<16x128xf32>
    %33 = arith.addf %28, %32 : vector<16x128xf32>
    %34 = vector.extract_strided_slice %24 {offsets = [2, 0], sizes = [16, 128], strides = [1, 1]} : vector<18x128xf32> to vector<16x128xf32>
    %c2_29 = arith.constant 2 : index
    %c0_30 = arith.constant 0 : index
    %c0_31 = arith.constant 0 : index
    %35 = vector.load %arg4[%c2_29, %c0_30, %c0_31] : memref<3x128x128xf32, #tpu.memory_space<vmem>>, vector<1x128x128xf32>
    %36 = vector.shape_cast %35 : vector<1x128x128xf32> to vector<128x128xf32>
    %cst_32 = arith.constant dense<0.000000e+00> : vector<16x128xf32>
    %37 = tpu.matmul %34, %36, %cst_32 {dimension_numbers = #tpu.dot_dimension_numbers<[1], [0], [0], [1], [0, 0, 1, 1], [], []>} : vector<16x128xf32>, vector<128x128xf32>, vector<16x128xf32> -> vector<16x128xf32>
    %38 = arith.addf %33, %37 : vector<16x128xf32>
    %c0_33 = arith.constant 0 : index
    %c0_34 = arith.constant 0 : index
    %39 = vector.load %arg5[%c0_33, %c0_34] : memref<1x128xf32, #tpu.memory_space<vmem>>, vector<1x128xf32>
    %40 = vector.broadcast %39 : vector<1x128xf32> to vector<16x128xf32>
    %41 = arith.addf %38, %40 : vector<16x128xf32>
    %cst_35 = arith.constant 0.000000e+00 : f32
    %42 = vector.broadcast %cst_35 : f32 to vector<16x128xf32>
    %43 = arith.maximumf %41, %42 : vector<16x128xf32>
    %44 = vector.extract_strided_slice %1 {offsets = [1, 0], sizes = [16, 128], strides = [1, 1]} : vector<18x128xf32> to vector<16x128xf32>
    %45 = arith.addf %43, %44 : vector<16x128xf32>
    %cst_36 = arith.constant 0.000000e+00 : f32
    %46 = vector.broadcast %cst_36 : f32 to vector<16x128xf32>
    %47 = arith.maximumf %45, %46 : vector<16x128xf32>
    %c0_37 = arith.constant 0 : index
    %c0_38 = arith.constant 0 : index
    %c0_39 = arith.constant 0 : index
    %48 = vector.load %arg6[%c0_37, %c0_38, %c0_39] : memref<1x16x128xf32, #tpu.memory_space<vmem>>, vector<1x16x128xf32>
    %49 = vector.shape_cast %48 : vector<1x16x128xf32> to vector<16x128xf32>
    %50 = vector.shape_cast %47 : vector<16x128xf32> to vector<1x16x128xf32>
    tpu.vector_store %arg6[%c0_37, %c0_38, %c0_39], %50 {strides = array<i32>} : memref<1x16x128xf32, #tpu.memory_space<vmem>>, vector<1x16x128xf32>,
    return
  }
  func.func @transform_0(%arg0: i32) -> (i32, i32, i32) {
    %c0_i32 = arith.constant 0 : i32
    %c0_i32_0 = arith.constant 0 : i32
    %c0_i32_1 = arith.constant 0 : i32
    return %arg0, %c0_i32, %c0_i32_0 : i32, i32, i32
  }
  func.func @transform_1(%arg0: i32) -> (i32, i32, i32) {
    %c0_i32 = arith.constant 0 : i32
    %c0_i32_0 = arith.constant 0 : i32
    %c0_i32_1 = arith.constant 0 : i32
    %c0_i32_2 = arith.constant 0 : i32
    return %c0_i32, %c0_i32_0, %c0_i32_1 : i32, i32, i32
  }
  func.func @transform_2(%arg0: i32) -> (i32, i32) {
    %c0_i32 = arith.constant 0 : i32
    %c0_i32_0 = arith.constant 0 : i32
    %c0_i32_1 = arith.constant 0 : i32
    return %c0_i32, %c0_i32_0 : i32, i32
  }
  func.func @transform_3(%arg0: i32) -> (i32, i32, i32) {
    %c0_i32 = arith.constant 0 : i32
    %c0_i32_0 = arith.constant 0 : i32
    %c0_i32_1 = arith.constant 0 : i32
    %c0_i32_2 = arith.constant 0 : i32
    return %c0_i32, %c0_i32_0, %c0_i32_1 : i32, i32, i32
  }
  func.func @transform_4(%arg0: i32) -> (i32, i32) {
    %c0_i32 = arith.constant 0 : i32
    %c0_i32_0 = arith.constant 0 : i32
    %c0_i32_1 = arith.constant 0 : i32
    return %c0_i32, %c0_i32_0 : i32, i32
  }
  func.func @transform_5(%arg0: i32) -> (i32, i32, i32) {
    %c0_i32 = arith.constant 0 : i32
    %c0_i32_0 = arith.constant 0 : i32
    %c0_i32_1 = arith.constant 0 : i32
    return %arg0, %c0_i32, %c0_i32_0 : i32, i32, i32
  }
}

</mosaic_0001>

<llo_original>
// kernel: residual_block_forward.1
$region0: #{residual_block_forward.1}
  #allocation0 [shape = 'u32[]', space=smem, size = 0x4, offset = 0x4, fixed_abs, tag = 'smem constant byte address 0x4 - core index']
  #allocation1 [shape = 'u32[72,128]{1,0:T(1,128)}', space=vmem, size = 0x9000, scoped, tag = 'internal scratch']
  #allocation2 [shape = 'f32[18,128]{1,0:T(8,128)}', space=vmem, size = 0x3000, scoped, tag = 'scratch operand']
  %s0 = inlined_call_operand.vmem [shape: f32[2,18,128], index: 0, kind: input, shape index: {}]
  %s1 = inlined_call_operand.vmem [shape: f32[3,128,128], index: 1, kind: input, shape index: {}]
  %s2 = inlined_call_operand.vmem [shape: f32[1,128], index: 2, kind: input, shape index: {}]
  %s3 = inlined_call_operand.vmem [shape: f32[3,128,128], index: 3, kind: input, shape index: {}]
  %s4 = inlined_call_operand.vmem [shape: f32[1,128], index: 4, kind: input, shape index: {}]
  %s5 = inlined_call_operand.vmem [shape: f32[2,16,128], index: 5, kind: output, shape index: {}]
  %s6 = sld [smem:[#allocation0]]
  $region53: #{residual_block_forward.1} parent=0
    _
  %s8 = ssub.s32 1, %s6
  %s9 = scalar_select 0, %s8, %s6
  loop: start=0, step=1, limit=4
  $region2: #{residual_block_forward.1} parent=0 // loop_pre_header
    _
  $region3: #{residual_block_forward.1} parent=0 // loop_header
    %s11 = sphi 0, %s15
    %p12 = scmp.ge.s32.totalorder %s11, 4
    %s21 = sphi 0, %s23
    %s24 = sphi 0, %s21
    %s25 = sphi 0, %s24
    %s41 = sphi 0, %s25
    %s45 = sphi 0, %s45
    %s47 = sphi 0, %s45
    %s48 = sphi 0, %s47
    %s62 = sphi 0, %s48
    %s66 = sphi 0, %s66
    %s68 = sphi 0, %s66
    %s69 = sphi 0, %s68
    %s83 = sphi 0, %s69
    %s87 = sphi 0, %s87
    %s89 = sphi 0, %s87
    %s90 = sphi 0, %s89
    %s104 = sphi 0, %s90
    %s108 = sphi 0, %s108
    %s110 = sphi 0, %s108
    %s111 = sphi 0, %s110
    %s125 = sphi 0, %s111
    %s131 = sphi 0, %s133
    %s134 = sphi 0, %s131
    %s135 = sphi 0, %s134
    %s151 = sphi 0, %s135
  $region4: #{residual_block_forward.1} parent=0 // loop_header_branch
    %14 = sbr.rel (%p12) target = $region8
  $region5: #{residual_block_forward.1} parent=0 // loop_body
    %s16 = ssub.s32 %s11, 1
    %s17 = ssub.s32 %s11, 2
    %s18 = sadd.s32 %s11, 1
    %s19 = ssub.s32 %s11, %s18
    %p20 = scmp.eq.s32.totalorder %s19, 0
    %s22 = sadd.s32 %s21, 1
    %s23 = scalar_select %p20, %s21, %s22
    %p26 = pneg %p20
    %p27 = scmp.eq.s32.totalorder %s11, 1
    %p28 = por %p26, %p27
    %p29 = scmp.ne.s32.totalorder %s21, %s24
    %p30 = scmp.eq.s32.totalorder %s11, 0
    %p31 = por %p29, %p30
    %p32 = scmp.ne.s32.totalorder %s21, %s24
    %p33 = scmp.eq.s32.totalorder %s16, 1
    %p34 = por %p32, %p33
    %p35 = scmp.ne.s32.totalorder %s24, %s25
    %p36 = scmp.eq.s32.totalorder %s16, 0
    %p37 = por %p35, %p36
    %p38 = scmp.ne.s32.totalorder %s24, %s25
    %p39 = scmp.eq.s32.totalorder %s17, 1
    %p40 = por %p38, %p39
    %p42 = scmp.ne.s32.totalorder %s25, %s41
    %p43 = scmp.eq.s32.totalorder %s17, 0
    %p44 = por %p42, %p43
    %s46 = sadd.s32 %s45, 1
    %p49 = scmp.eq.s32.totalorder %s11, 1
    %p50 = scmp.ne.s32.totalorder %s45, %s47
    %p51 = scmp.eq.s32.totalorder %s11, 0
    %p52 = por %p50, %p51
    %p53 = scmp.ne.s32.totalorder %s45, %s47
    %p54 = scmp.eq.s32.totalorder %s16, 1
    %p55 = por %p53, %p54
    %p56 = scmp.ne.s32.totalorder %s47, %s48
    %p57 = scmp.eq.s32.totalorder %s16, 0
    %p58 = por %p56, %p57
    %p59 = scmp.ne.s32.totalorder %s47, %s48
    %p60 = scmp.eq.s32.totalorder %s17, 1
    %p61 = por %p59, %p60
    %p63 = scmp.ne.s32.totalorder %s48, %s62
    %p64 = scmp.eq.s32.totalorder %s17, 0
    %p65 = por %p63, %p64
    %s67 = sadd.s32 %s66, 1
    %p70 = scmp.eq.s32.totalorder %s11, 1
    %p71 = scmp.ne.s32.totalorder %s66, %s68
    %p72 = scmp.eq.s32.totalorder %s11, 0
    %p73 = por %p71, %p72
    %p74 = scmp.ne.s32.totalorder %s66, %s68
    %p75 = scmp.eq.s32.totalorder %s16, 1
    %p76 = por %p74, %p75
    %p77 = scmp.ne.s32.totalorder %s68, %s69
    %p78 = scmp.eq.s32.totalorder %s16, 0
    %p79 = por %p77, %p78
    %p80 = scmp.ne.s32.totalorder %s68, %s69
    %p81 = scmp.eq.s32.totalorder %s17, 1
    %p82 = por %p80, %p81
    %p84 = scmp.ne.s32.totalorder %s69, %s83
    %p85 = scmp.eq.s32.totalorder %s17, 0
    %p86 = por %p84, %p85
    %s88 = sadd.s32 %s87, 1
    %p91 = scmp.eq.s32.totalorder %s11, 1
    %p92 = scmp.ne.s32.totalorder %s87, %s89
    %p93 = scmp.eq.s32.totalorder %s11, 0
    %p94 = por %p92, %p93
    %p95 = scmp.ne.s32.totalorder %s87, %s89
    %p96 = scmp.eq.s32.totalorder %s16, 1
    %p97 = por %p95, %p96
    %p98 = scmp.ne.s32.totalorder %s89, %s90
    %p99 = scmp.eq.s32.totalorder %s16, 0
    %p100 = por %p98, %p99
    %p101 = scmp.ne.s32.totalorder %s89, %s90
    %p102 = scmp.eq.s32.totalorder %s17, 1
    %p103 = por %p101, %p102
    %p105 = scmp.ne.s32.totalorder %s90, %s104
    %p106 = scmp.eq.s32.totalorder %s17, 0
    %p107 = por %p105, %p106
    %s109 = sadd.s32 %s108, 1
    %p112 = scmp.eq.s32.totalorder %s11, 1
    %p113 = scmp.ne.s32.totalorder %s108, %s110
    %p114 = scmp.eq.s32.totalorder %s11, 0
    %p115 = por %p113, %p114
    %p116 = scmp.ne.s32.totalorder %s108, %s110
    %p117 = scmp.eq.s32.totalorder %s16, 1
    %p118 = por %p116, %p117
    %p119 = scmp.ne.s32.totalorder %s110, %s111
    %p120 = scmp.eq.s32.totalorder %s16, 0
    %p121 = por %p119, %p120
    %p122 = scmp.ne.s32.totalorder %s110, %s111
    %p123 = scmp.eq.s32.totalorder %s17, 1
    %p124 = por %p122, %p123
    %p126 = scmp.ne.s32.totalorder %s111, %s125
    %p127 = scmp.eq.s32.totalorder %s17, 0
    %p128 = por %p126, %p127
    %s129 = ssub.s32 %s11, %s18
    %p130 = scmp.eq.s32.totalorder %s129, 0
    %s132 = sadd.s32 %s131, 1
    %s133 = scalar_select %p130, %s131, %s132
    %p136 = pneg %p130
    %p137 = scmp.eq.s32.totalorder %s11, 1
    %p138 = por %p136, %p137
    %p139 = scmp.ne.s32.totalorder %s131, %s134
    %p140 = scmp.eq.s32.totalorder %s11, 0
    %p141 = por %p139, %p140
    %p142 = scmp.ne.s32.totalorder %s131, %s134
    %p143 = scmp.eq.s32.totalorder %s16, 1
    %p144 = por %p142, %p143
    %p145 = scmp.ne.s32.totalorder %s134, %s135
    %p146 = scmp.eq.s32.totalorder %s16, 0
    %p147 = por %p145, %p146
    %p148 = scmp.ne.s32.totalorder %s134, %s135
    %p149 = scmp.eq.s32.totalorder %s17, 1
    %p150 = por %p148, %p149
    %p152 = scmp.ne.s32.totalorder %s135, %s151
    %p153 = scmp.eq.s32.totalorder %s17, 0
    %p154 = por %p152, %p153
    %p155 = scmp.le.s32.totalorder 1, %s11
    %p156 = scmp.lt.s32.totalorder %s11, 3
    %p157 = pnand %p155, %p156
    %p158 = pneg %p157
    // Predicated region
    $region9: #{residual_block_forward.1} parent=5 // pred_check
      _
    $region10: #{residual_block_forward.1} parent=5 // pred_check_branch
      %160 = sbr.rel (%p157) target = $region12
    $region11: #{residual_block_forward.1} parent=5 // pred_region
      %s161 = ssub.s32 %s11, 1
      // Predicated region
      $region13: #{residual_block_forward.1} parent=11 // pred_check
        %p162 = pneg %p58
      $region14: #{residual_block_forward.1} parent=11 // pred_check_branch
        %164 = sbr.rel (%p162) target = $region16
      $region15: #{residual_block_forward.1} parent=11 // pred_region
        _
      $region16: #{residual_block_forward.1} parent=11 // pred_fallthru
        _
      // Predicated region
      $region17: #{residual_block_forward.1} parent=11 // pred_check
        %p165 = pneg %p79
      $region18: #{residual_block_forward.1} parent=11 // pred_check_branch
        %167 = sbr.rel (%p165) target = $region20
      $region19: #{residual_block_forward.1} parent=11 // pred_region
        _
      $region20: #{residual_block_forward.1} parent=11 // pred_fallthru
        _
      // Predicated region
      $region21: #{residual_block_forward.1} parent=11 // pred_check
        %p168 = pneg %p100
      $region22: #{residual_block_forward.1} parent=11 // pred_check_branch
        %170 = sbr.rel (%p168) target = $region24
      $region23: #{residual_block_forward.1} parent=11 // pred_region
        _
      $region24: #{residual_block_forward.1} parent=11 // pred_fallthru
        _
      // Predicated region
      $region25: #{residual_block_forward.1} parent=11 // pred_check
        %p171 = pneg %p121
      $region26: #{residual_block_forward.1} parent=11 // pred_check_branch
        %173 = sbr.rel (%p171) target = $region28
      $region27: #{residual_block_forward.1} parent=11 // pred_region
        _
      $region28: #{residual_block_forward.1} parent=11 // pred_fallthru
        _
    $region12: #{residual_block_forward.1} parent=5 // pred_fallthru
      _
    %p174 = scmp.lt.s32.totalorder %s11, 2
    // Predicated region
    $region29: #{residual_block_forward.1} parent=5 // pred_check
      %p175 = pneg %p174
    $region30: #{residual_block_forward.1} parent=5 // pred_check_branch
      %177 = sbr.rel (%p175) target = $region32
    $region31: #{residual_block_forward.1} parent=5 // pred_region
      // Predicated region
      $region33: #{residual_block_forward.1} parent=31 // pred_check
        %p178 = pneg %p31
      $region34: #{residual_block_forward.1} parent=31 // pred_check_branch
        %180 = sbr.rel (%p178) target = $region36
      $region35: #{residual_block_forward.1} parent=31 // pred_region
        %p181 = scmp.lt.s32.totalorder %s11, 1
        %s182 = scalar_select %p181, %s11, 1
        %s183 = smul.addr %s182, 3
        %s184 = smul.addr %s183, 8
        %s185 = scalar_lea.vmem %s0, %s184
      $region36: #{residual_block_forward.1} parent=31 // pred_fallthru
        _
    $region32: #{residual_block_forward.1} parent=5 // pred_fallthru
      _
    %p186 = scmp.le.s32.totalorder 1, %s11
    %p187 = scmp.lt.s32.totalorder %s11, 3
    %p188 = pnand %p186, %p187
    %p189 = pneg %p188
    // Predicated region
    $region37: #{residual_block_forward.1} parent=5 // pred_check
      _
    $region38: #{residual_block_forward.1} parent=5 // pred_check_branch
      %191 = sbr.rel (%p188) target = $region40
    $region39: #{residual_block_forward.1} parent=5 // pred_region
      %s192 = ssub.s32 %s11, 1
      %p193 = scmp.lt.s32.totalorder %s16, 1
      %s194 = scalar_select %p193, %s16, 1
      %s195 = smul.addr %s194, 3
      %s196 = smul.addr %s195, 8
      %s197 = scalar_lea.vmem %s0, %s196
      %p198 = pneg %p37
      %p199 = pneg %p34
      %p200 = pneg %p58
      %p201 = pneg %p55
      %p202 = pneg %p79
      %p203 = pneg %p76
      %p204 = pneg %p100
      %p205 = pneg %p97
      %p206 = pneg %p121
      %p207 = pneg %p118
      %p208 = pneg %p147
      %p209 = pneg %p144
      %p210 = scmp.lt.s32.totalorder %s16, 1
      %s211 = scalar_select %p210, %s16, 1
      %s212 = smul.addr %s211, 2
      %s213 = smul.addr %s212, 8
      %s214 = scalar_lea.vmem %s5, %s213
      %p215 = scmp.lt.s32.totalorder %s16, 1
      %s216 = scalar_select %p215, %s16, 1
      %s217 = smul.addr %s216, 3
      %s218 = smul.addr %s217, 8
      %s219 = scalar_lea.vmem %s0, %s218
      %p220 = scmp.lt.s32.totalorder %s16, 1
      %s221 = scalar_select %p220, %s16, 1
      %s222 = smul.addr %s221, 2
      %s223 = smul.addr %s222, 8
      %s224 = scalar_lea.vmem %s5, %s223
      %v225 = vld [vmem:[%s219] sm:$0xff]
      %v226 = vld [vmem:[%s219 + $0x8] sm:$0xff]
      %v227 = vld [vmem:[%s219 + $0x10] sm:$0x3]
      %v228 = vld [vmem:[%s1] sm:$0xff]
      %v229 = vld [vmem:[%s1 + $0x8] sm:$0xff]
      %v230 = vld [vmem:[%s1 + $0x10] sm:$0xff]
      %v231 = vld [vmem:[%s1 + $0x18] sm:$0xff]
      %v232 = vld [vmem:[%s1 + $0x20] sm:$0xff]
      %v233 = vld [vmem:[%s1 + $0x28] sm:$0xff]
      %v234 = vld [vmem:[%s1 + $0x30] sm:$0xff]
      %v235 = vld [vmem:[%s1 + $0x38] sm:$0xff]
      %v236 = vld [vmem:[%s1 + $0x40] sm:$0xff]
      %v237 = vld [vmem:[%s1 + $0x48] sm:$0xff]
      %v238 = vld [vmem:[%s1 + $0x50] sm:$0xff]
      %v239 = vld [vmem:[%s1 + $0x58] sm:$0xff]
      %v240 = vld [vmem:[%s1 + $0x60] sm:$0xff]
      %v241 = vld [vmem:[%s1 + $0x68] sm:$0xff]
      %v242 = vld [vmem:[%s1 + $0x70] sm:$0xff]
      %v243 = vld [vmem:[%s1 + $0x78] sm:$0xff]
      %s244 = scalar_lea.vmem %s1, 128
      %v245 = vld [vmem:[%s244] sm:$0xff]
      %v246 = vld [vmem:[%s244 + $0x8] sm:$0xff]
      %v247 = vld [vmem:[%s244 + $0x10] sm:$0xff]
      %v248 = vld [vmem:[%s244 + $0x18] sm:$0xff]
      %v249 = vld [vmem:[%s244 + $0x20] sm:$0xff]
      %v250 = vld [vmem:[%s244 + $0x28] sm:$0xff]
      %v251 = vld [vmem:[%s244 + $0x30] sm:$0xff]
      %v252 = vld [vmem:[%s244 + $0x38] sm:$0xff]
      %v253 = vld [vmem:[%s244 + $0x40] sm:$0xff]
      %v254 = vld [vmem:[%s244 + $0x48] sm:$0xff]
      %v255 = vld [vmem:[%s244 + $0x50] sm:$0xff]
      %v256 = vld [vmem:[%s244 + $0x58] sm:$0xff]
      %v257 = vld [vmem:[%s244 + $0x60] sm:$0xff]
      %v258 = vld [vmem:[%s244 + $0x68] sm:$0xff]
      %v259 = vld [vmem:[%s244 + $0x70] sm:$0xff]
      %v260 = vld [vmem:[%s244 + $0x78] sm:$0xff]
      %vm264 = vcmask 1046528
      %v265 = vrot.slane %v225, 1
      %v266 = vrot.slane %v226, 1
      %v267 = vsel %vm264, %v265, %v266
      %v268 = vrot.slane %v227, 1
      %v269 = vsel %vm264, %v266, %v268
      %272 = vmatpush.msra.mxu0 %v260
      %273 = vmatpush.msra.mxu0 %v259
      %274 = vmatpush.msra.mxu0 %v258
      %275 = vmatpush.msra.mxu0 %v257
      %276 = vmatpush.msra.mxu0 %v256
      %277 = vmatpush.msra.mxu0 %v255
      %278 = vmatpush.msra.mxu0 %v254
      %279 = vmatpush.msra.mxu0 %v253
      %280 = vmatpush.msra.mxu0 %v252
      %281 = vmatpush.msra.mxu0 %v251
      %282 = vmatpush.msra.mxu0 %v250
      %283 = vmatpush.msra.mxu0 %v249
      %284 = vmatpush.msra.mxu0 %v248
      %285 = vmatpush.msra.mxu0 %v247
      %286 = vmatpush.msra.mxu0 %v246
      %287 = vmatpush.msra.mxu0 %v245
      %288 = vmatmul.f32.gmra.mxu0 %v267
      %v289 = vpop.f32.mrf.mxu0
      %v290 = vadd.f32 0.0, %v289
      %291 = vmatmul.f32.gmra.mxu0 %v269
      %v292 = vpop.f32.mrf.mxu0
      %v293 = vadd.f32 0.0, %v292
      %294 = vdwg.mxu0
      %295 = vmatpush.msra.mxu0 %v243
      %296 = vmatpush.msra.mxu0 %v242
      %297 = vmatpush.msra.mxu0 %v241
      %298 = vmatpush.msra.mxu0 %v240
      %299 = vmatpush.msra.mxu0 %v239
      %300 = vmatpush.msra.mxu0 %v238
      %301 = vmatpush.msra.mxu0 %v237
      %302 = vmatpush.msra.mxu0 %v236
      %303 = vmatpush.msra.mxu0 %v235
      %304 = vmatpush.msra.mxu0 %v234
      %305 = vmatpush.msra.mxu0 %v233
      %306 = vmatpush.msra.mxu0 %v232
      %307 = vmatpush.msra.mxu0 %v231
      %308 = vmatpush.msra.mxu0 %v230
      %309 = vmatpush.msra.mxu0 %v229
      %310 = vmatpush.msra.mxu0 %v228
      %311 = vmatmul.f32.gmra.mxu0 %v225
      %v312 = vpop.f32.mrf.mxu0
      %v313 = vadd.f32 %v290, %v312
      %314 = vmatmul.f32.gmra.mxu0 %v226
      %v315 = vpop.f32.mrf.mxu0
      %v316 = vadd.f32 %v293, %v315
      %317 = vdwg.mxu0
      %s318 = scalar_lea.vmem %s1, 256
      %v319 = vld [vmem:[%s318] sm:$0xff]
      %v320 = vld [vmem:[%s318 + $0x8] sm:$0xff]
      %v321 = vld [vmem:[%s318 + $0x10] sm:$0xff]
      %v322 = vld [vmem:[%s318 + $0x18] sm:$0xff]
      %v323 = vld [vmem:[%s318 + $0x20] sm:$0xff]
      %v324 = vld [vmem:[%s318 + $0x28] sm:$0xff]
      %v325 = vld [vmem:[%s318 + $0x30] sm:$0xff]
      %v326 = vld [vmem:[%s318 + $0x38] sm:$0xff]
      %v327 = vld [vmem:[%s318 + $0x40] sm:$0xff]
      %v328 = vld [vmem:[%s318 + $0x48] sm:$0xff]
      %v329 = vld [vmem:[%s318 + $0x50] sm:$0xff]
      %v330 = vld [vmem:[%s318 + $0x58] sm:$0xff]
      %v331 = vld [vmem:[%s318 + $0x60] sm:$0xff]
      %v332 = vld [vmem:[%s318 + $0x68] sm:$0xff]
      %v333 = vld [vmem:[%s318 + $0x70] sm:$0xff]
      %v334 = vld [vmem:[%s318 + $0x78] sm:$0xff]
      %vm335 = vcmask 1045504
      %v336 = vrot.slane %v225, 2
      %v337 = vrot.slane %v226, 2
      %v338 = vsel %vm335, %v336, %v337
      %v339 = vrot.slane %v227, 2
      %v340 = vsel %vm335, %v337, %v339
      %343 = vmatpush.msra.mxu0 %v334
      %344 = vmatpush.msra.mxu0 %v333
      %345 = vmatpush.msra.mxu0 %v332
      %346 = vmatpush.msra.mxu0 %v331
      %347 = vmatpush.msra.mxu0 %v330
      %348 = vmatpush.msra.mxu0 %v329
      %349 = vmatpush.msra.mxu0 %v328
      %350 = vmatpush.msra.mxu0 %v327
      %351 = vmatpush.msra.mxu0 %v326
      %352 = vmatpush.msra.mxu0 %v325
      %353 = vmatpush.msra.mxu0 %v324
      %354 = vmatpush.msra.mxu0 %v323
      %355 = vmatpush.msra.mxu0 %v322
      %356 = vmatpush.msra.mxu0 %v321
      %357 = vmatpush.msra.mxu0 %v320
      %358 = vmatpush.msra.mxu0 %v319
      %359 = vmatmul.f32.gmra.mxu0 %v338
      %v360 = vpop.f32.mrf.mxu0
      %v361 = vadd.f32 0.0, %v360
      %362 = vmatmul.f32.gmra.mxu0 %v340
      %v363 = vpop.f32.mrf.mxu0
      %v364 = vadd.f32 0.0, %v363
      %365 = vdwg.mxu0
      %v366 = vadd.f32 %v313, %v361
      %v367 = vadd.f32 %v316, %v364
      %v368 = vld [vmem:[%s2] sm:$0x1]
      %v370 = vperm.slane %v368, 0
      %v372 = vadd.f32 %v366, %v370
      %v373 = vadd.f32 %v367, %v370
      %v374 = vmax.f32 %v372, 0.0
      %v375 = vmax.f32 %v373, 0.0
      %376 = vst [vmem:[#allocation2] sm:$0xff] 0.0
      %377 = vst [vmem:[#allocation2 + $0x8] sm:$0xff] 0.0
      %378 = vst [vmem:[#allocation2 + $0x10] sm:$0x3] 0.0
      %379 = vst [vmem:[#allocation2 + $0x1] sm:$0xff] %v374
      %380 = vst [vmem:[#allocation2 + $0x9] sm:$0xff] %v375
      %v381 = vld [vmem:[#allocation2] sm:$0xff]
      %v382 = vld [vmem:[#allocation2 + $0x8] sm:$0xff]
      %v383 = vld [vmem:[#allocation2 + $0x10] sm:$0x3]
      %v384 = vld [vmem:[%s3] sm:$0xff]
      %v385 = vld [vmem:[%s3 + $0x8] sm:$0xff]
      %v386 = vld [vmem:[%s3 + $0x10] sm:$0xff]
      %v387 = vld [vmem:[%s3 + $0x18] sm:$0xff]
      %v388 = vld [vmem:[%s3 + $0x20] sm:$0xff]
      %v389 = vld [vmem:[%s3 + $0x28] sm:$0xff]
      %v390 = vld [vmem:[%s3 + $0x30] sm:$0xff]
      %v391 = vld [vmem:[%s3 + $0x38] sm:$0xff]
      %v392 = vld [vmem:[%s3 + $0x40] sm:$0xff]
      %v393 = vld [vmem:[%s3 + $0x48] sm:$0xff]
      %v394 = vld [vmem:[%s3 + $0x50] sm:$0xff]
      %v395 = vld [vmem:[%s3 + $0x58] sm:$0xff]
      %v396 = vld [vmem:[%s3 + $0x60] sm:$0xff]
      %v397 = vld [vmem:[%s3 + $0x68] sm:$0xff]
      %v398 = vld [vmem:[%s3 + $0x70] sm:$0xff]
      %v399 = vld [vmem:[%s3 + $0x78] sm:$0xff]
      %s400 = scalar_lea.vmem %s3, 128
      %v401 = vld [vmem:[%s400] sm:$0xff]
      %v402 = vld [vmem:[%s400 + $0x8] sm:$0xff]
      %v403 = vld [vmem:[%s400 + $0x10] sm:$0xff]
      %v404 = vld [vmem:[%s400 + $0x18] sm:$0xff]
      %v405 = vld [vmem:[%s400 + $0x20] sm:$0xff]
      %v406 = vld [vmem:[%s400 + $0x28] sm:$0xff]
      %v407 = vld [vmem:[%s400 + $0x30] sm:$0xff]
      %v408 = vld [vmem:[%s400 + $0x38] sm:$0xff]
      %v409 = vld [vmem:[%s400 + $0x40] sm:$0xff]
      %v410 = vld [vmem:[%s400 + $0x48] sm:$0xff]
      %v411 = vld [vmem:[%s400 + $0x50] sm:$0xff]
      %v412 = vld [vmem:[%s400 + $0x58] sm:$0xff]
      %v413 = vld [vmem:[%s400 + $0x60] sm:$0xff]
      %v414 = vld [vmem:[%s400 + $0x68] sm:$0xff]
      %v415 = vld [vmem:[%s400 + $0x70] sm:$0xff]
      %v416 = vld [vmem:[%s400 + $0x78] sm:$0xff]
      %v420 = vrot.slane %v381, 1
      %v421 = vrot.slane %v382, 1
      %v422 = vsel %vm264, %v420, %v421
      %v423 = vrot.slane %v383, 1
      %v424 = vsel %vm264, %v421, %v423
      %427 = vmatpush.msra.mxu0 %v416
      %428 = vmatpush.msra.mxu0 %v415
      %429 = vmatpush.msra.mxu0 %v414
      %430 = vmatpush.msra.mxu0 %v413
      %431 = vmatpush.msra.mxu0 %v412
      %432 = vmatpush.msra.mxu0 %v411
      %433 = vmatpush.msra.mxu0 %v410
      %434 = vmatpush.msra.mxu0 %v409
      %435 = vmatpush.msra.mxu0 %v408
      %436 = vmatpush.msra.mxu0 %v407
      %437 = vmatpush.msra.mxu0 %v406
      %438 = vmatpush.msra.mxu0 %v405
      %439 = vmatpush.msra.mxu0 %v404
      %440 = vmatpush.msra.mxu0 %v403
      %441 = vmatpush.msra.mxu0 %v402
      %442 = vmatpush.msra.mxu0 %v401
      %443 = vmatmul.f32.gmra.mxu0 %v422
      %v444 = vpop.f32.mrf.mxu0
      %v445 = vadd.f32 0.0, %v444
      %446 = vmatmul.f32.gmra.mxu0 %v424
      %v447 = vpop.f32.mrf.mxu0
      %v448 = vadd.f32 0.0, %v447
      %449 = vdwg.mxu0
      %450 = vmatpush.msra.mxu0 %v399
      %451 = vmatpush.msra.mxu0 %v398
      %452 = vmatpush.msra.mxu0 %v397
      %453 = vmatpush.msra.mxu0 %v396
      %454 = vmatpush.msra.mxu0 %v395
      %455 = vmatpush.msra.mxu0 %v394
      %456 = vmatpush.msra.mxu0 %v393
      %457 = vmatpush.msra.mxu0 %v392
      %458 = vmatpush.msra.mxu0 %v391
      %459 = vmatpush.msra.mxu0 %v390
      %460 = vmatpush.msra.mxu0 %v389
      %461 = vmatpush.msra.mxu0 %v388
      %462 = vmatpush.msra.mxu0 %v387
      %463 = vmatpush.msra.mxu0 %v386
      %464 = vmatpush.msra.mxu0 %v385
      %465 = vmatpush.msra.mxu0 %v384
      %466 = vmatmul.f32.gmra.mxu0 %v381
      %v467 = vpop.f32.mrf.mxu0
      %v468 = vadd.f32 %v445, %v467
      %469 = vmatmul.f32.gmra.mxu0 %v382
      %v470 = vpop.f32.mrf.mxu0
      %v471 = vadd.f32 %v448, %v470
      %472 = vdwg.mxu0
      %s473 = scalar_lea.vmem %s3, 256
      %v474 = vld [vmem:[%s473] sm:$0xff]
      %v475 = vld [vmem:[%s473 + $0x8] sm:$0xff]
      %v476 = vld [vmem:[%s473 + $0x10] sm:$0xff]
      %v477 = vld [vmem:[%s473 + $0x18] sm:$0xff]
      %v478 = vld [vmem:[%s473 + $0x20] sm:$0xff]
      %v479 = vld [vmem:[%s473 + $0x28] sm:$0xff]
      %v480 = vld [vmem:[%s473 + $0x30] sm:$0xff]
      %v481 = vld [vmem:[%s473 + $0x38] sm:$0xff]
      %v482 = vld [vmem:[%s473 + $0x40] sm:$0xff]
      %v483 = vld [vmem:[%s473 + $0x48] sm:$0xff]
      %v484 = vld [vmem:[%s473 + $0x50] sm:$0xff]
      %v485 = vld [vmem:[%s473 + $0x58] sm:$0xff]
      %v486 = vld [vmem:[%s473 + $0x60] sm:$0xff]
      %v487 = vld [vmem:[%s473 + $0x68] sm:$0xff]
      %v488 = vld [vmem:[%s473 + $0x70] sm:$0xff]
      %v489 = vld [vmem:[%s473 + $0x78] sm:$0xff]
      %v490 = vrot.slane %v381, 2
      %v491 = vrot.slane %v382, 2
      %v492 = vsel %vm335, %v490, %v491
      %v493 = vrot.slane %v383, 2
      %v494 = vsel %vm335, %v491, %v493
      %497 = vmatpush.msra.mxu0 %v489
      %498 = vmatpush.msra.mxu0 %v488
      %499 = vmatpush.msra.mxu0 %v487
      %500 = vmatpush.msra.mxu0 %v486
      %501 = vmatpush.msra.mxu0 %v485
      %502 = vmatpush.msra.mxu0 %v484
      %503 = vmatpush.msra.mxu0 %v483
      %504 = vmatpush.msra.mxu0 %v482
      %505 = vmatpush.msra.mxu0 %v481
      %506 = vmatpush.msra.mxu0 %v480
      %507 = vmatpush.msra.mxu0 %v479
      %508 = vmatpush.msra.mxu0 %v478
      %509 = vmatpush.msra.mxu0 %v477
      %510 = vmatpush.msra.mxu0 %v476
      %511 = vmatpush.msra.mxu0 %v475
      %512 = vmatpush.msra.mxu0 %v474
      %513 = vmatmul.f32.gmra.mxu0 %v492
      %v514 = vpop.f32.mrf.mxu0
      %v515 = vadd.f32 0.0, %v514
      %516 = vmatmul.f32.gmra.mxu0 %v494
      %v517 = vpop.f32.mrf.mxu0
      %v518 = vadd.f32 0.0, %v517
      %519 = vdwg.mxu0
      %v520 = vadd.f32 %v468, %v515
      %v521 = vadd.f32 %v471, %v518
      %v522 = vld [vmem:[%s4] sm:$0x1]
      %v524 = vperm.slane %v522, 0
      %v526 = vadd.f32 %v520, %v524
      %v527 = vadd.f32 %v521, %v524
      %v528 = vmax.f32 %v526, 0.0
      %v529 = vmax.f32 %v527, 0.0
      %v530 = vadd.f32 %v528, %v267
      %v531 = vadd.f32 %v529, %v269
      %v532 = vmax.f32 %v530, 0.0
      %v533 = vmax.f32 %v531, 0.0
      %534 = vst [vmem:[%s224] sm:$0xff] %v532
      %535 = vst [vmem:[%s224 + $0x8] sm:$0xff] %v533
      %p536 = scmp.lt.s32.totalorder %s16, 1
      %s537 = scalar_select %p536, %s16, 1
      %s538 = smul.addr %s537, 2
      %s539 = smul.addr %s538, 8
      %s540 = scalar_lea.vmem %s5, %s539
      // Predicated region
      $region41: #{residual_block_forward.1} parent=39 // pred_check
        %p541 = pneg %p144
      $region42: #{residual_block_forward.1} parent=39 // pred_check_branch
        %543 = sbr.rel (%p541) target = $region44
      $region43: #{residual_block_forward.1} parent=39 // pred_region
        _
      $region44: #{residual_block_forward.1} parent=39 // pred_fallthru
        _
    $region40: #{residual_block_forward.1} parent=5 // pred_fallthru
      _
    %p544 = scmp.le.s32.totalorder 2, %s11
    // Predicated region
    $region45: #{residual_block_forward.1} parent=5 // pred_check
      %p545 = pneg %p544
    $region46: #{residual_block_forward.1} parent=5 // pred_check_branch
      %547 = sbr.rel (%p545) target = $region48
    $region47: #{residual_block_forward.1} parent=5 // pred_region
      %s548 = ssub.s32 %s11, 2
      // Predicated region
      $region49: #{residual_block_forward.1} parent=47 // pred_check
        %p549 = pneg %p150
      $region50: #{residual_block_forward.1} parent=47 // pred_check_branch
        %551 = sbr.rel (%p549) target = $region52
      $region51: #{residual_block_forward.1} parent=47 // pred_region
        %p552 = scmp.lt.s32.totalorder %s17, 1
        %s553 = scalar_select %p552, %s17, 1
        %s554 = smul.addr %s553, 2
        %s555 = smul.addr %s554, 8
        %s556 = scalar_lea.vmem %s5, %s555
      $region52: #{residual_block_forward.1} parent=47 // pred_fallthru
        _
    $region48: #{residual_block_forward.1} parent=5 // pred_fallthru
      _
  $region6: #{residual_block_forward.1} parent=0 // loop_footer
    %s15 = sadd.s32 1, %s11
  $region7: #{residual_block_forward.1} parent=0 // loop_footer_branch
    %10 = sbr.rel target = $region3
  $region8: #{residual_block_forward.1} parent=0 // loop_exit
    _

</llo_original>
